<compile_context>
chip_gen: v7x
topology: tpu7x:2x2x1
jax: 0.10.0
libtpu: 0.0.40
codegen_flags: <defaults>
</compile_context>

<pallas_src>
import functools
from typing import NamedTuple

import jax
import jax.numpy as jnp
from jax.experimental import pallas as pl
from jax.experimental.pallas import tpu as pltpu


_VMEM_HEADROOM = 6 << 20  # Mosaic internal scratch + spill slack


def _round_up(x: int, m: int) -> int:
    return ((x + m - 1) // m) * m


@functools.lru_cache(maxsize=None)
def _vmem_capacity_bytes() -> int:
    try:
        cap = getattr(pltpu.get_tpu_info(), "vmem_capacity_bytes", None)
        if cap:
            return int(cap)
    except Exception:
        pass
    return 64 << 20  # conservative default (v7x per-TensorCore)


@functools.lru_cache(maxsize=None)
def _device_kind() -> str:
    try:
        return jax.devices()[0].device_kind.lower()
    except Exception:
        return ""


# --------------------------------------------------------------------------
# One-time parameter preprocessing (hoisted out of the per-call path).
# --------------------------------------------------------------------------
class JAISMLPParams(NamedTuple):
    w_gate: jax.Array   # (H, 2*I_pad): ti-block j = [W_fc[:, j] | W_fc2[:, j]]
    b_gate: jax.Array   # (1, 2*I_pad) f32, interleaved the same way
    w_proj: jax.Array   # (I_pad, H)
    b_proj: jax.Array   # (1, H) f32
    ti: int             # intermediate tile width baked into the interleave


def prepare_jais_mlp_params(w_fc, b_fc, w_fc2, b_fc2, w_proj, b_proj, *,
                            compute_dtype=jnp.bfloat16, ti=None):
    """Run once at parameter-load time; do NOT call per forward pass."""
    H, I = w_fc.shape
    assert w_fc2.shape == (H, I) and w_proj.shape == (I, H)

    if ti is None:
        # v7x (64 MiB VMEM): ti=256 keeps double-buffered weight tiles small
        # enough to afford a large token tile; 128 MiB parts take ti=512.
        ti = 256 if _vmem_capacity_bytes() <= (64 << 20) else 512
        ti = min(ti, _round_up(I, 128))
    ti = _round_up(ti, 128)
    I_pad = _round_up(I, ti)          # keeps h1/h2 split lane-aligned
    n_i = I_pad // ti
    pad = I_pad - I

    w_fc_p = jnp.pad(w_fc, ((0, 0), (0, pad))) if pad else w_fc
    w_fc2_p = jnp.pad(w_fc2, ((0, 0), (0, pad))) if pad else w_fc2
    b_fc_p = jnp.pad(b_fc, (0, pad)) if pad else b_fc
    b_fc2_p = jnp.pad(b_fc2, (0, pad)) if pad else b_fc2
    w_proj_p = jnp.pad(w_proj, ((0, pad), (0, 0))) if pad else w_proj

    # Fuse c_fc / c_fc2 into one RHS so the kernel does a single wide matmul.
    w_gate = jnp.concatenate(
        [w_fc_p.reshape(H, n_i, ti), w_fc2_p.reshape(H, n_i, ti)], axis=-1
    ).reshape(H, 2 * I_pad).astype(compute_dtype)
    b_gate = jnp.concatenate(
        [b_fc_p.reshape(n_i, ti), b_fc2_p.reshape(n_i, ti)], axis=-1
    ).reshape(1, 2 * I_pad).astype(jnp.float32)

    return JAISMLPParams(
        w_gate=w_gate,
        b_gate=b_gate,
        w_proj=w_proj_p.astype(compute_dtype),
        b_proj=b_proj.reshape(1, H).astype(jnp.float32),
        ti=ti,
    )


# --------------------------------------------------------------------------
# Kernel
# --------------------------------------------------------------------------
def _jais_mlp_kernel(x_ref, wg_ref, bg_ref, wp_ref, bp_ref, o_ref, acc_ref):
    j = pl.program_id(1)
    ti = wp_ref.shape[0]  # intermediate tile width

    @pl.when(j == 0)
    def _init():
        acc_ref[...] = jnp.zeros_like(acc_ref)

    # Cast x on the VPU (hidden under MXU slack) instead of a wrapper pass.
    xb = x_ref[...].astype(wg_ref.dtype)

    # Fused gate matmul: (tm, H) @ (H, 2*ti) -> (tm, 2*ti), f32 accumulation.
    h = jnp.dot(xb, wg_ref[...], preferred_element_type=jnp.float32)
    h = h + bg_ref[...]
    h1 = h[:, :ti]            # c_fc  slice (lane-aligned: ti % 128 == 0)
    h2 = h[:, ti:]            # c_fc2 slice

    # SwiGLU: x1 * silu(x2), in f32 (VPU/EUP work hides under MXU).
    act = h1 * (h2 * jax.nn.sigmoid(h2))

    # Partial c_proj: (tm, ti) @ (ti, H), accumulated into f32 scratch.
    acc_ref[...] += jnp.dot(act.astype(wp_ref.dtype), wp_ref[...],
                            preferred_element_type=jnp.float32)

    @pl.when(j == pl.num_programs(1) - 1)
    def _finalize():
        o_ref[...] = (acc_ref[...] + bp_ref[...]).astype(o_ref.dtype)


# --------------------------------------------------------------------------
# VMEM budget model + per-generation tile selection
# --------------------------------------------------------------------------
def _vmem_need_bytes(tm, ti, H, x_isz, w_isz, o_isz, x_bufs):
    need = x_bufs * tm * H * x_isz          # x tile(s)
    need += 2 * H * (2 * ti) * w_isz        # fused gate weight, double-buffered
    need += 2 * (2 * ti) * 4                # fused gate bias (f32)
    need += 2 * ti * H * w_isz              # proj weight, double-buffered
    need += 2 * H * 4                       # proj bias (f32)
    need += 2 * tm * H * o_isz              # output tile
    need += tm * H * 4                      # f32 accumulator scratch
    need += 2 * tm * (2 * ti) * 4           # f32 h / act temporaries
    return need


def _choose_tm(T, H, ti, x_isz, w_isz, o_isz, vmem_cap):
    kind = _device_kind()
    if vmem_cap <= (64 << 20):
        tm_target = 512        # v7x: push intensity past the ~310 flop/B crossover
    elif "v5" in kind:
        tm_target = 256        # v5e already MXU-bound at 256; bigger = pressure
    else:
        tm_target = 512        # v6e: HBM-bound below ~680 flop/B -> bigger reuse
    tm = max(8, _round_up(min(tm_target, _round_up(T, 8)), 8))
    # Budget with a double-buffered x so the non-Buffered fallback also fits.
    while tm > 8 and (_vmem_need_bytes(tm, ti, H, x_isz, w_isz, o_isz, 2)
                      + _VMEM_HEADROOM) > vmem_cap:
        tm = _round_up(tm - 64, 8) if tm > 64 else max(8, tm // 2)
    return tm


# --------------------------------------------------------------------------
# Forward pass
# --------------------------------------------------------------------------
def jais_mlp(x, params: JAISMLPParams):
    """x: [T, H] activations. Returns [T, H] in x.dtype."""
    T, H = x.shape
    out_dtype = x.dtype
    w_gate, b_gate, w_proj, b_proj, ti = params
    two_i = w_gate.shape[1]
    I_pad = two_i // 2
    assert w_gate.shape == (H, two_i) and w_proj.shape == (I_pad, H)
    n_i = I_pad // ti

    x_isz = jnp.dtype(x.dtype).itemsize
    w_isz = jnp.dtype(w_gate.dtype).itemsize
    o_isz = jnp.dtype(out_dtype).itemsize
    vmem_cap = _vmem_capacity_bytes()

    def run(single_buffer: bool):
        tm = _choose_tm(T, H, ti, x_isz, w_isz, o_isz, vmem_cap)
        T_pad = _round_up(T, tm)
        x_in = jnp.pad(x, ((0, T_pad - T), (0, 0))) if T_pad != T else x
        n_t = T_pad // tm

        # x / b_proj block indices are constant over the inner j axis -> the
        # second pipeline buffer is pure VMEM waste; single-buffer them.
        extra = dict(pipeline_mode=pl.Buffered(1)) if single_buffer else {}

        in_specs = [
            pl.BlockSpec((tm, H), lambda i, j: (i, 0), **extra),      # x
            pl.BlockSpec((H, 2 * ti), lambda i, j: (0, j)),           # fused gate W
            pl.BlockSpec((1, 2 * ti), lambda i, j: (0, j)),           # fused gate b
            pl.BlockSpec((ti, H), lambda i, j: (j, 0)),               # W_proj tile
            pl.BlockSpec((1, H), lambda i, j: (0, 0), **extra),       # b_proj
        ]
        out_spec = pl.BlockSpec((tm, H), lambda i, j: (i, 0))

        need = _vmem_need_bytes(tm, ti, H, x_isz, w_isz, o_isz, 2)
        vmem_limit = int(min(max(need + _VMEM_HEADROOM, 32 << 20), vmem_cap))

        flops = (2 * T_pad * H * (2 * I_pad)      # fused gate matmul
                 + 2 * T_pad * I_pad * H          # proj matmul
                 + 5 * T_pad * I_pad)             # swiglu elementwise
        # Weights are re-streamed once per token tile (n_t times).
        bytes_accessed = (T_pad * H * x_isz + T_pad * H * o_isz
                          + n_t * (H * 2 * I_pad + I_pad * H) * w_isz
                          + n_t * (2 * I_pad + H) * 4)

        out = pl.pallas_call(
            _jais_mlp_kernel,
            out_shape=jax.ShapeDtypeStruct((T_pad, H), out_dtype),
            grid_spec=pltpu.PrefetchScalarGridSpec(
                num_scalar_prefetch=0,
                grid=(n_t, n_i),
                in_specs=in_specs,
                out_specs=out_spec,
                scratch_shapes=[pltpu.VMEM((tm, H), jnp.float32)],
            ),
            compiler_params=pltpu.CompilerParams(
                dimension_semantics=("parallel", "arbitrary"),
                vmem_limit_bytes=vmem_limit),
            cost_estimate=pl.CostEstimate(
                flops=int(flops),
                transcendentals=int(T_pad * I_pad),
                bytes_accessed=int(bytes_accessed)),
        )(x_in, w_gate, b_gate, w_proj, b_proj)
        return out[:T] if T_pad != T else out

    try:
        return run(single_buffer=True)
    except Exception:
        # pl.Buffered / pipeline_mode unavailable on this jax version:
        # identical semantics with default double-buffering.
        return run(single_buffer=False)


def jais_mlp_reference(x, w_fc, b_fc, w_fc2, b_fc2, w_proj, b_proj):
    h1 = x @ w_fc + b_fc
    h2 = x @ w_fc2 + b_fc2
    return (h1 * (h2 * jax.nn.sigmoid(h2))) @ w_proj + b_proj


if __name__ == "__main__":
    # Small shapes consistent with the module: hidden_size=32, intermediate=64,
    # batch=2, seq=8 -> 16 tokens.
    batch, seq, hidden, intermediate = 2, 8, 32, 64
    T = batch * seq

    key = jax.random.PRNGKey(0)
    k = jax.random.split(key, 7)
    x = jax.random.normal(k[0], (T, hidden), dtype=jnp.float32)

    # Weights stored as [in, out] (transpose of the torch Linear layout).
    w_fc = jax.random.normal(k[1], (hidden, intermediate), jnp.float32) * 0.05
    b_fc = jax.random.normal(k[2], (intermediate,), jnp.float32) * 0.01
    w_fc2 = jax.random.normal(k[3], (hidden, intermediate), jnp.float32) * 0.05
    b_fc2 = jax.random.normal(k[4], (intermediate,), jnp.float32) * 0.01
    w_proj = jax.random.normal(k[5], (intermediate, hidden), jnp.float32) * 0.05
    b_proj = jax.random.normal(k[6], (hidden,), jnp.float32) * 0.01

    ref = jais_mlp_reference(x, w_fc, b_fc, w_fc2, b_fc2, w_proj, b_proj)

    # f32 compute path: exact-numerics check against the reference.
    params_f32 = prepare_jais_mlp_params(
        w_fc, b_fc, w_fc2, b_fc2, w_proj, b_proj, compute_dtype=jnp.float32)
    out_f32 = jax.block_until_ready(jais_mlp(x, params_f32))
    assert out_f32.shape == (T, hidden)
    assert jnp.allclose(out_f32, ref, atol=1e-5, rtol=1e-5), "f32 mismatch"

    # bf16 weight path (production setting): looser tolerance.
    params_bf16 = prepare_jais_mlp_params(
        w_fc, b_fc, w_fc2, b_fc2, w_proj, b_proj, compute_dtype=jnp.bfloat16)
    out_bf16 = jax.block_until_ready(jais_mlp(x, params_bf16))
    assert out_bf16.shape == (T, hidden)
    assert jnp.allclose(out_bf16, ref, atol=3e-2, rtol=3e-2), "bf16 mismatch"

    print("KERNEL_OK")
</pallas_src>

<mosaic_0001>
module attributes {stable_mosaic.version = 11 : i64} {
  func.func @_jais_mlp_kernel(%arg0: i32, %arg1: i32, %arg2: memref<16x32xf32, #tpu.memory_space<vmem>>, %arg3: memref<32x256xf32, #tpu.memory_space<vmem>>, %arg4: memref<1x256xf32, #tpu.memory_space<vmem>>, %arg5: memref<128x32xf32, #tpu.memory_space<vmem>>, %arg6: memref<1x32xf32, #tpu.memory_space<vmem>>, %arg7: memref<16x32xf32, #tpu.memory_space<vmem>>, %arg8: memref<16x32xf32, #tpu.memory_space<vmem>>) attributes {dimension_semantics = [#tpu.dimension_semantics<parallel>, #tpu.dimension_semantics<arbitrary>], iteration_bounds = array<i64: 1, 1>, scalar_prefetch = 0 : i64, scratch_operands = 1 : i64, tpu.core_type = #tpu.core_type<tc>, window_params = [{pipeline_mode = #tpu.pipeline_mode<synchronous>, transform_indices = @transform_0, window_bounds = array<i64: 16, 32>}, {transform_indices = @transform_1, window_bounds = array<i64: 32, 256>}, {transform_indices = @transform_2, window_bounds = array<i64: 1, 256>}, {transform_indices = @transform_3, window_bounds = array<i64: 128, 32>}, {pipeline_mode = #tpu.pipeline_mode<synchronous>, transform_indices = @transform_4, window_bounds = array<i64: 1, 32>}, {transform_indices = @transform_5, window_bounds = array<i64: 16, 32>}]} {
    %c0_i32 = arith.constant 0 : i32
    %0 = arith.cmpi eq, %arg1, %c0_i32 : i32
    %1 = arith.extui %0 : i1 to i32
    %c0_i32_0 = arith.constant 0 : i32
    %2 = arith.cmpi ne, %1, %c0_i32_0 : i32
    scf.if %2 {
      %cst_16 = arith.constant 0.000000e+00 : f32
      %26 = vector.broadcast %cst_16 : f32 to vector<16x32xf32>
      %c0_17 = arith.constant 0 : index
      %c0_18 = arith.constant 0 : index
      %27 = vector.load %arg8[%c0_17, %c0_18] : memref<16x32xf32, #tpu.memory_space<vmem>>, vector<16x32xf32>
      tpu.vector_store %arg8[%c0_17, %c0_18], %26 {strides = array<i32>} : memref<16x32xf32, #tpu.memory_space<vmem>>, vector<16x32xf32>,
    } else {
    }
    %c0 = arith.constant 0 : index
    %c0_1 = arith.constant 0 : index
    %3 = vector.load %arg2[%c0, %c0_1] : memref<16x32xf32, #tpu.memory_space<vmem>>, vector<16x32xf32>
    %c0_2 = arith.constant 0 : index
    %c0_3 = arith.constant 0 : index
    %4 = vector.load %arg3[%c0_2, %c0_3] : memref<32x256xf32, #tpu.memory_space<vmem>>, vector<32x256xf32>
    %cst = arith.constant dense<0.000000e+00> : vector<16x256xf32>
    %5 = tpu.matmul %3, %4, %cst {dimension_numbers = #tpu.dot_dimension_numbers<[1], [0], [0], [1], [0, 0, 1, 1], [], []>} : vector<16x32xf32>, vector<32x256xf32>, vector<16x256xf32> -> vector<16x256xf32>
    %c0_4 = arith.constant 0 : index
    %c0_5 = arith.constant 0 : index
    %6 = vector.load %arg4[%c0_4, %c0_5] : memref<1x256xf32, #tpu.memory_space<vmem>>, vector<1x256xf32>
    %7 = vector.broadcast %6 : vector<1x256xf32> to vector<16x256xf32>
    %8 = arith.addf %5, %7 : vector<16x256xf32>
    %9 = vector.extract_strided_slice %8 {offsets = [0, 0], sizes = [16, 128], strides = [1, 1]} : vector<16x256xf32> to vector<16x128xf32>
    %10 = vector.extract_strided_slice %8 {offsets = [0, 128], sizes = [16, 128], strides = [1, 1]} : vector<16x256xf32> to vector<16x128xf32>
    %11 = arith.negf %10 : vector<16x128xf32>
    %12 = math.exp %11 : vector<16x128xf32>
    %cst_6 = arith.constant 1.000000e+00 : f32
    %13 = vector.broadcast %cst_6 : f32 to vector<16x128xf32>
    %14 = arith.addf %13, %12 : vector<16x128xf32>
    %15 = arith.divf %13, %14 : vector<16x128xf32>
    %16 = arith.mulf %10, %15 : vector<16x128xf32>
    %17 = arith.mulf %9, %16 : vector<16x128xf32>
    %c0_7 = arith.constant 0 : index
    %c0_8 = arith.constant 0 : index
    %18 = vector.load %arg8[%c0_7, %c0_8] : memref<16x32xf32, #tpu.memory_space<vmem>>, vector<16x32xf32>
    %c0_9 = arith.constant 0 : index
    %c0_10 = arith.constant 0 : index
    %19 = vector.load %arg5[%c0_9, %c0_10] : memref<128x32xf32, #tpu.memory_space<vmem>>, vector<128x32xf32>
    %cst_11 = arith.constant dense<0.000000e+00> : vector<16x32xf32>
    %20 = tpu.matmul %17, %19, %cst_11 {dimension_numbers = #tpu.dot_dimension_numbers<[1], [0], [0], [1], [0, 0, 1, 1], [], []>} : vector<16x128xf32>, vector<128x32xf32>, vector<16x32xf32> -> vector<16x32xf32>
    %21 = arith.addf %18, %20 : vector<16x32xf32>
    %c0_12 = arith.constant 0 : index
    %c0_13 = arith.constant 0 : index
    %22 = vector.load %arg8[%c0_12, %c0_13] : memref<16x32xf32, #tpu.memory_space<vmem>>, vector<16x32xf32>
    tpu.vector_store %arg8[%c0_12, %c0_13], %21 {strides = array<i32>} : memref<16x32xf32, #tpu.memory_space<vmem>>, vector<16x32xf32>,
    %c0_i32_14 = arith.constant 0 : i32
    %23 = arith.cmpi eq, %arg1, %c0_i32_14 : i32
    %24 = arith.extui %23 : i1 to i32
    %c0_i32_15 = arith.constant 0 : i32
    %25 = arith.cmpi ne, %24, %c0_i32_15 : i32
    scf.if %25 {
      %c0_16 = arith.constant 0 : index
      %c0_17 = arith.constant 0 : index
      %26 = vector.load %arg8[%c0_16, %c0_17] : memref<16x32xf32, #tpu.memory_space<vmem>>, vector<16x32xf32>
      %c0_18 = arith.constant 0 : index
      %c0_19 = arith.constant 0 : index
      %27 = vector.load %arg6[%c0_18, %c0_19] : memref<1x32xf32, #tpu.memory_space<vmem>>, vector<1x32xf32>
      %28 = vector.broadcast %27 : vector<1x32xf32> to vector<16x32xf32>
      %29 = arith.addf %26, %28 : vector<16x32xf32>
      %c0_20 = arith.constant 0 : index
      %c0_21 = arith.constant 0 : index
      %30 = vector.load %arg7[%c0_20, %c0_21] : memref<16x32xf32, #tpu.memory_space<vmem>>, vector<16x32xf32>
      tpu.vector_store %arg7[%c0_20, %c0_21], %29 {strides = array<i32>} : memref<16x32xf32, #tpu.memory_space<vmem>>, vector<16x32xf32>,
    } else {
    }
    return
  }
  func.func @transform_0(%arg0: i32, %arg1: i32) -> (i32, i32) {
    %c0_i32 = arith.constant 0 : i32
    %c0_i32_0 = arith.constant 0 : i32
    return %arg0, %c0_i32 : i32, i32
  }
  func.func @transform_1(%arg0: i32, %arg1: i32) -> (i32, i32) {
    %c0_i32 = arith.constant 0 : i32
    %c0_i32_0 = arith.constant 0 : i32
    return %c0_i32, %arg1 : i32, i32
  }
  func.func @transform_2(%arg0: i32, %arg1: i32) -> (i32, i32) {
    %c0_i32 = arith.constant 0 : i32
    %c0_i32_0 = arith.constant 0 : i32
    return %c0_i32, %arg1 : i32, i32
  }
  func.func @transform_3(%arg0: i32, %arg1: i32) -> (i32, i32) {
    %c0_i32 = arith.constant 0 : i32
    %c0_i32_0 = arith.constant 0 : i32
    return %arg1, %c0_i32 : i32, i32
  }
  func.func @transform_4(%arg0: i32, %arg1: i32) -> (i32, i32) {
    %c0_i32 = arith.constant 0 : i32
    %c0_i32_0 = arith.constant 0 : i32
    %c0_i32_1 = arith.constant 0 : i32
    return %c0_i32, %c0_i32_0 : i32, i32
  }
  func.func @transform_5(%arg0: i32, %arg1: i32) -> (i32, i32) {
    %c0_i32 = arith.constant 0 : i32
    %c0_i32_0 = arith.constant 0 : i32
    return %arg0, %c0_i32 : i32, i32
  }
}

module attributes {stable_mosaic.version = 11 : i64} {
  func.func @_jais_mlp_kernel(%arg0: i32, %arg1: i32, %arg2: memref<16x32xf32, #tpu.memory_space<vmem>>, %arg3: memref<32x256xf32, #tpu.memory_space<vmem>>, %arg4: memref<1x256xf32, #tpu.memory_space<vmem>>, %arg5: memref<128x32xf32, #tpu.memory_space<vmem>>, %arg6: memref<1x32xf32, #tpu.memory_space<vmem>>, %arg7: memref<16x32xf32, #tpu.memory_space<vmem>>, %arg8: memref<16x32xf32, #tpu.memory_space<vmem>>) attributes {dimension_semantics = [#tpu.dimension_semantics<parallel>, #tpu.dimension_semantics<arbitrary>], iteration_bounds = array<i64: 1, 1>, scalar_prefetch = 0 : i64, scratch_operands = 1 : i64, tpu.core_type = #tpu.core_type<tc>, window_params = [{transform_indices = @transform_0, window_bounds = array<i64: 16, 32>}, {transform_indices = @transform_1, window_bounds = array<i64: 32, 256>}, {transform_indices = @transform_2, window_bounds = array<i64: 1, 256>}, {transform_indices = @transform_3, window_bounds = array<i64: 128, 32>}, {pipeline_mode = #tpu.pipeline_mode<synchronous>, transform_indices = @transform_4, window_bounds = array<i64: 1, 32>}, {transform_indices = @transform_5, window_bounds = array<i64: 16, 32>}]} {
    %c0_i32 = arith.constant 0 : i32
    %0 = arith.cmpi eq, %arg1, %c0_i32 : i32
    %1 = arith.extui %0 : i1 to i32
    %c0_i32_0 = arith.constant 0 : i32
    %2 = arith.cmpi ne, %1, %c0_i32_0 : i32
    scf.if %2 {
      %cst_16 = arith.constant 0.000000e+00 : f32
      %26 = vector.broadcast %cst_16 : f32 to vector<16x32xf32>
      %c0_17 = arith.constant 0 : index
      %c0_18 = arith.constant 0 : index
      %27 = vector.load %arg8[%c0_17, %c0_18] : memref<16x32xf32, #tpu.memory_space<vmem>>, vector<16x32xf32>
      tpu.vector_store %arg8[%c0_17, %c0_18], %26 {strides = array<i32>} : memref<16x32xf32, #tpu.memory_space<vmem>>, vector<16x32xf32>,
    } else {
    }
    %c0 = arith.constant 0 : index
    %c0_1 = arith.constant 0 : index
    %3 = vector.load %arg2[%c0, %c0_1] : memref<16x32xf32, #tpu.memory_space<vmem>>, vector<16x32xf32>
    %c0_2 = arith.constant 0 : index
    %c0_3 = arith.constant 0 : index
    %4 = vector.load %arg3[%c0_2, %c0_3] : memref<32x256xf32, #tpu.memory_space<vmem>>, vector<32x256xf32>
    %cst = arith.constant dense<0.000000e+00> : vector<16x256xf32>
    %5 = tpu.matmul %3, %4, %cst {dimension_numbers = #tpu.dot_dimension_numbers<[1], [0], [0], [1], [0, 0, 1, 1], [], []>} : vector<16x32xf32>, vector<32x256xf32>, vector<16x256xf32> -> vector<16x256xf32>
    %c0_4 = arith.constant 0 : index
    %c0_5 = arith.constant 0 : index
    %6 = vector.load %arg4[%c0_4, %c0_5] : memref<1x256xf32, #tpu.memory_space<vmem>>, vector<1x256xf32>
    %7 = vector.broadcast %6 : vector<1x256xf32> to vector<16x256xf32>
    %8 = arith.addf %5, %7 : vector<16x256xf32>
    %9 = vector.extract_strided_slice %8 {offsets = [0, 0], sizes = [16, 128], strides = [1, 1]} : vector<16x256xf32> to vector<16x128xf32>
    %10 = vector.extract_strided_slice %8 {offsets = [0, 128], sizes = [16, 128], strides = [1, 1]} : vector<16x256xf32> to vector<16x128xf32>
    %11 = arith.negf %10 : vector<16x128xf32>
    %12 = math.exp %11 : vector<16x128xf32>
    %cst_6 = arith.constant 1.000000e+00 : f32
    %13 = vector.broadcast %cst_6 : f32 to vector<16x128xf32>
    %14 = arith.addf %13, %12 : vector<16x128xf32>
    %15 = arith.divf %13, %14 : vector<16x128xf32>
    %16 = arith.mulf %10, %15 : vector<16x128xf32>
    %17 = arith.mulf %9, %16 : vector<16x128xf32>
    %c0_7 = arith.constant 0 : index
    %c0_8 = arith.constant 0 : index
    %18 = vector.load %arg8[%c0_7, %c0_8] : memref<16x32xf32, #tpu.memory_space<vmem>>, vector<16x32xf32>
    %c0_9 = arith.constant 0 : index
    %c0_10 = arith.constant 0 : index
    %19 = vector.load %arg5[%c0_9, %c0_10] : memref<128x32xf32, #tpu.memory_space<vmem>>, vector<128x32xf32>
    %cst_11 = arith.constant dense<0.000000e+00> : vector<16x32xf32>
    %20 = tpu.matmul %17, %19, %cst_11 {dimension_numbers = #tpu.dot_dimension_numbers<[1], [0], [0], [1], [0, 0, 1, 1], [], []>} : vector<16x128xf32>, vector<128x32xf32>, vector<16x32xf32> -> vector<16x32xf32>
    %21 = arith.addf %18, %20 : vector<16x32xf32>
    %c0_12 = arith.constant 0 : index
    %c0_13 = arith.constant 0 : index
    %22 = vector.load %arg8[%c0_12, %c0_13] : memref<16x32xf32, #tpu.memory_space<vmem>>, vector<16x32xf32>
    tpu.vector_store %arg8[%c0_12, %c0_13], %21 {strides = array<i32>} : memref<16x32xf32, #tpu.memory_space<vmem>>, vector<16x32xf32>,
    %c0_i32_14 = arith.constant 0 : i32
    %23 = arith.cmpi eq, %arg1, %c0_i32_14 : i32
    %24 = arith.extui %23 : i1 to i32
    %c0_i32_15 = arith.constant 0 : i32
    %25 = arith.cmpi ne, %24, %c0_i32_15 : i32
    scf.if %25 {
      %c0_16 = arith.constant 0 : index
      %c0_17 = arith.constant 0 : index
      %26 = vector.load %arg8[%c0_16, %c0_17] : memref<16x32xf32, #tpu.memory_space<vmem>>, vector<16x32xf32>
      %c0_18 = arith.constant 0 : index
      %c0_19 = arith.constant 0 : index
      %27 = vector.load %arg6[%c0_18, %c0_19] : memref<1x32xf32, #tpu.memory_space<vmem>>, vector<1x32xf32>
      %28 = vector.broadcast %27 : vector<1x32xf32> to vector<16x32xf32>
      %29 = arith.addf %26, %28 : vector<16x32xf32>
      %c0_20 = arith.constant 0 : index
      %c0_21 = arith.constant 0 : index
      %30 = vector.load %arg7[%c0_20, %c0_21] : memref<16x32xf32, #tpu.memory_space<vmem>>, vector<16x32xf32>
      tpu.vector_store %arg7[%c0_20, %c0_21], %29 {strides = array<i32>} : memref<16x32xf32, #tpu.memory_space<vmem>>, vector<16x32xf32>,
    } else {
    }
    return
  }
  func.func @transform_0(%arg0: i32, %arg1: i32) -> (i32, i32) {
    %c0_i32 = arith.constant 0 : i32
    %c0_i32_0 = arith.constant 0 : i32
    return %arg0, %c0_i32 : i32, i32
  }
  func.func @transform_1(%arg0: i32, %arg1: i32) -> (i32, i32) {
    %c0_i32 = arith.constant 0 : i32
    %c0_i32_0 = arith.constant 0 : i32
    return %c0_i32, %arg1 : i32, i32
  }
  func.func @transform_2(%arg0: i32, %arg1: i32) -> (i32, i32) {
    %c0_i32 = arith.constant 0 : i32
    %c0_i32_0 = arith.constant 0 : i32
    return %c0_i32, %arg1 : i32, i32
  }
  func.func @transform_3(%arg0: i32, %arg1: i32) -> (i32, i32) {
    %c0_i32 = arith.constant 0 : i32
    %c0_i32_0 = arith.constant 0 : i32
    return %arg1, %c0_i32 : i32, i32
  }
  func.func @transform_4(%arg0: i32, %arg1: i32) -> (i32, i32) {
    %c0_i32 = arith.constant 0 : i32
    %c0_i32_0 = arith.constant 0 : i32
    %c0_i32_1 = arith.constant 0 : i32
    return %c0_i32, %c0_i32_0 : i32, i32
  }
  func.func @transform_5(%arg0: i32, %arg1: i32) -> (i32, i32) {
    %c0_i32 = arith.constant 0 : i32
    %c0_i32_0 = arith.constant 0 : i32
    return %arg0, %c0_i32 : i32, i32
  }
}

</mosaic_0001>

<llo_original>
// kernel: tpu_custom_call.1
$region0: #{tpu_custom_call.1}
  #allocation0 [shape = 'u32[]', space=smem, size = 0x4, offset = 0x4, fixed_abs, tag = 'smem constant byte address 0x4 - core index']
  #allocation1 [shape = 'u32[144,128]{1,0:T(1,128)}', space=vmem, size = 0x12000, scoped, tag = 'internal scratch']
  #allocation2 [shape = 'f32[16,32]{1,0:T(8,128)}', space=vmem, size = 0x2000, scoped, tag = 'scratch operand']
  %s0 = inlined_call_operand.vmem [shape: f32[16,32], index: 0, kind: input, shape index: {}]
  %s1 = inlined_call_operand.vmem [shape: f32[32,256], index: 1, kind: input, shape index: {}]
  %s2 = inlined_call_operand.vmem [shape: f32[1,256], index: 2, kind: input, shape index: {}]
  %s3 = inlined_call_operand.vmem [shape: f32[128,32], index: 3, kind: input, shape index: {}]
  %s4 = inlined_call_operand.vmem [shape: f32[1,32], index: 4, kind: input, shape index: {}]
  %s5 = inlined_call_operand.hbm [shape: f32[16,32], index: 5, kind: output, shape index: {}]
  %s6 = sld [smem:[#allocation0]]
  $region38: #{tpu_custom_call.1} parent=0
    _
  %s8 = ssub.s32 1, %s6
  %s9 = scalar_select 0, %s8, %s6
  $region1: #{tpu_custom_call.1} parent=0
    #allocation3 [shape = 'u8[8192]{0}', space=vmem, size = 0x2000, scoped, tag = 'output window, operand 0, single buffered']
    #allocation4 [shape = 's32[1]{0}', space=sflag, size = 0x4, scoped, tag = 'scoped memory for tpu_custom_call.1']
    %10 = vsyncpa [#allocation4], 0
    // Predicated region
    $region2: #{tpu_custom_call.1} parent=1 // pred_check
      _
    $region3: #{tpu_custom_call.1} parent=1 // pred_check_branch
      %12 = sbr.rel (0) target = $region5
    $region4: #{tpu_custom_call.1} parent=1 // pred_region
      _
    $region5: #{tpu_custom_call.1} parent=1 // pred_fallthru
      _
    // Predicated region
    $region6: #{tpu_custom_call.1} parent=1 // pred_check
      _
    $region7: #{tpu_custom_call.1} parent=1 // pred_check_branch
      %14 = sbr.rel (0) target = $region9
    $region8: #{tpu_custom_call.1} parent=1 // pred_region
      _
    $region9: #{tpu_custom_call.1} parent=1 // pred_fallthru
      _
    // Predicated region
    $region10: #{tpu_custom_call.1} parent=1 // pred_check
      _
    $region11: #{tpu_custom_call.1} parent=1 // pred_check_branch
      %16 = sbr.rel (0) target = $region13
    $region12: #{tpu_custom_call.1} parent=1 // pred_region
      _
    $region13: #{tpu_custom_call.1} parent=1 // pred_fallthru
      _
    // Predicated region
    $region14: #{tpu_custom_call.1} parent=1 // pred_check
      _
    $region15: #{tpu_custom_call.1} parent=1 // pred_check_branch
      %18 = sbr.rel (0) target = $region17
    $region16: #{tpu_custom_call.1} parent=1 // pred_region
      _
    $region17: #{tpu_custom_call.1} parent=1 // pred_fallthru
      _
    // Predicated region
    $region18: #{tpu_custom_call.1} parent=1 // pred_check
      _
    $region19: #{tpu_custom_call.1} parent=1 // pred_check_branch
      %20 = sbr.rel (0) target = $region21
    $region20: #{tpu_custom_call.1} parent=1 // pred_region
      _
    $region21: #{tpu_custom_call.1} parent=1 // pred_fallthru
      _
    %p21 = scmp.eq.s32.totalorder 0, 0
    // Predicated region
    $region22: #{tpu_custom_call.1} parent=1 // pred_check
      %p22 = pneg %p21
    $region23: #{tpu_custom_call.1} parent=1 // pred_check_branch
      %24 = sbr.rel (%p22) target = $region25
    $region24: #{tpu_custom_call.1} parent=1 // pred_region
      %vm25 = vcmask 261120
      %26 = vst.msk [vmem:[#allocation2] sm:$0xff] %vm25, 0.0
      %27 = vst.msk [vmem:[#allocation2 + $0x8] sm:$0xff] %vm25, 0.0
    $region25: #{tpu_custom_call.1} parent=1 // pred_fallthru
      _
    %v28 = vld [vmem:[%s0] sm:$0xff]
    %v29 = vld [vmem:[%s0 + $0x8] sm:$0xff]
    %v30 = vld [vmem:[%s1] sm:$0xff]
    %v31 = vld [vmem:[%s1 + $0x8] sm:$0xff]
    %v32 = vld [vmem:[%s1 + $0x10] sm:$0xff]
    %v33 = vld [vmem:[%s1 + $0x18] sm:$0xff]
    %v34 = vld [vmem:[%s1 + $0x20] sm:$0xff]
    %v35 = vld [vmem:[%s1 + $0x28] sm:$0xff]
    %v36 = vld [vmem:[%s1 + $0x30] sm:$0xff]
    %v37 = vld [vmem:[%s1 + $0x38] sm:$0xff]
    %v38 = vld [vmem:[%s2] sm:$0x3]
    %v40 = vlaneseq
    %v41 = vshrl.u32 %v40, 7
    %v42 = vsub.s32 0, %v41
    %v43 = vrot.slane %v38, %v42
    %v44 = vlaneseq
    %v45 = vshrl.u32 %v44, 7
    %v46 = vsub.s32 1, %v45
    %v47 = vrot.slane %v38, %v46
    %vm50 = vcmask 261120
    %v52 = vsel %vm50, %v28, 0
    %v55 = vsel %vm50, %v29, 0
    %57 = vmatprep.subr.mxu0 %v31
    %58 = vmatpush1.msra.mxu0 %v30
    %59 = vmatprep.subr.mxu0 %v33
    %60 = vmatpush1.msra.mxu0 %v32
    %61 = vmatprep.subr.mxu0 %v35
    %62 = vmatpush1.msra.mxu0 %v34
    %63 = vmatprep.subr.mxu0 %v37
    %64 = vmatpush1.msra.mxu0 %v36
    %65 = vmatprep.subr.mxu0 0.0
    %66 = vmatpush1.msra.mxu0 0.0
    %67 = vmatprep.subr.mxu0 0.0
    %68 = vmatpush1.msra.mxu0 0.0
    %69 = vmatprep.subr.mxu0 0.0
    %70 = vmatpush1.msra.mxu0 0.0
    %71 = vmatprep.subr.mxu0 0.0
    %72 = vmatpush1.msra.mxu0 0.0
    %73 = vmatprep.subr.mxu0 0.0
    %74 = vmatpush1.msra.mxu0 0.0
    %75 = vmatprep.subr.mxu0 0.0
    %76 = vmatpush1.msra.mxu0 0.0
    %77 = vmatprep.subr.mxu0 0.0
    %78 = vmatpush1.msra.mxu0 0.0
    %79 = vmatprep.subr.mxu0 0.0
    %80 = vmatpush1.msra.mxu0 0.0
    %81 = vmatprep.subr.mxu0 0.0
    %82 = vmatpush1.msra.mxu0 0.0
    %83 = vmatprep.subr.mxu0 0.0
    %84 = vmatpush1.msra.mxu0 0.0
    %85 = vmatprep.subr.mxu0 0.0
    %86 = vmatpush1.msra.mxu0 0.0
    %87 = vmatprep.subr.mxu0 0.0
    %88 = vmatpush1.msra.mxu0 0.0
    %89 = vmatprep.subr.mxu0 0.0
    %90 = vmatpush1.msra.mxu0 0.0
    %91 = vmatprep.subr.mxu0 0.0
    %92 = vmatpush1.msra.mxu0 0.0
    %93 = vmatprep.subr.mxu0 0.0
    %94 = vmatpush1.msra.mxu0 0.0
    %95 = vmatprep.subr.mxu0 0.0
    %96 = vmatpush1.msra.mxu0 0.0
    %97 = vmatprep.subr.mxu0 0.0
    %98 = vmatpush1.msra.mxu0 0.0
    %99 = vmatprep.subr.mxu0 0.0
    %100 = vmatpush1.msra.mxu0 0.0
    %101 = vmatprep.subr.mxu0 0.0
    %102 = vmatpush1.msra.mxu0 0.0
    %103 = vmatprep.subr.mxu0 0.0
    %104 = vmatpush1.msra.mxu0 0.0
    %105 = vmatprep.subr.mxu0 0.0
    %106 = vmatpush1.msra.mxu0 0.0
    %107 = vmatprep.subr.mxu0 0.0
    %108 = vmatpush1.msra.mxu0 0.0
    %109 = vmatprep.subr.mxu0 0.0
    %110 = vmatpush1.msra.mxu0 0.0
    %111 = vmatprep.subr.mxu0 0.0
    %112 = vmatpush1.msra.mxu0 0.0
    %113 = vmatprep.subr.mxu0 0.0
    %114 = vmatpush1.msra.mxu0 0.0
    %115 = vmatprep.subr.mxu0 0.0
    %116 = vmatpush1.msra.mxu0 0.0
    %117 = vmatprep.subr.mxu0 0.0
    %118 = vmatpush1.msra.mxu0 0.0
    %119 = vmatprep.subr.mxu0 0.0
    %120 = vmatpush1.msra.mxu0 0.0
    %121 = vmatprep.mubr.f32.mxu0 0.0
    %122 = vmatmul.mubr.f32.gmra.mrb[0].mxu0 %v52
    %v123 = vpop.f32.mrb[0].mxu0
    %v124 = vadd.f32 %v43, %v123
    %v125 = vpop.f32.mrb[0].mxu0
    %v126 = vadd.f32 %v47, %v125
    %127 = vmatprep.mubr.f32.mxu0 0.0
    %128 = vmatmul.mubr.f32.gmra.mrb[0].mxu0 %v55
    %v129 = vpop.f32.mrb[0].mxu0
    %v130 = vadd.f32 %v43, %v129
    %v131 = vpop.f32.mrb[0].mxu0
    %v132 = vadd.f32 %v47, %v131
    %133 = vdwg.mxu0
    %v134 = vxor.u32 %v126, 2147483648
    %v135 = vxor.u32 %v132, 2147483648
    %v136 = vmul.f32 %v134, 1.442695
    %v137 = vpow.pop %v136
    %v138 = vmul.f32 %v135, 1.442695
    %v139 = vpow.pop %v138
    %v140 = vadd.f32 %v137, 1.0
    %v141 = vadd.f32 %v139, 1.0
    %v142 = vrcp.pop %v140
    %v143 = vmul.f32 1.0, %v142
    %v144 = vrcp.pop %v141
    %v145 = vmul.f32 1.0, %v144
    %v146 = vmul.f32 %v126, %v143
    %v147 = vmul.f32 %v132, %v145
    %v148 = vmul.f32 %v124, %v146
    %v149 = vmul.f32 %v130, %v147
    %v150 = vld [vmem:[#allocation2] sm:$0xff]
    %v151 = vld [vmem:[#allocation2 + $0x8] sm:$0xff]
    %v152 = vld [vmem:[%s3] sm:$0xff]
    %v153 = vld [vmem:[%s3 + $0x8] sm:$0xff]
    %v154 = vld [vmem:[%s3 + $0x10] sm:$0xff]
    %v155 = vld [vmem:[%s3 + $0x18] sm:$0xff]
    %v156 = vld [vmem:[%s3 + $0x20] sm:$0xff]
    %v157 = vld [vmem:[%s3 + $0x28] sm:$0xff]
    %v158 = vld [vmem:[%s3 + $0x30] sm:$0xff]
    %v159 = vld [vmem:[%s3 + $0x38] sm:$0xff]
    %v160 = vld [vmem:[%s3 + $0x40] sm:$0xff]
    %v161 = vld [vmem:[%s3 + $0x48] sm:$0xff]
    %v162 = vld [vmem:[%s3 + $0x50] sm:$0xff]
    %v163 = vld [vmem:[%s3 + $0x58] sm:$0xff]
    %v164 = vld [vmem:[%s3 + $0x60] sm:$0xff]
    %v165 = vld [vmem:[%s3 + $0x68] sm:$0xff]
    %v166 = vld [vmem:[%s3 + $0x70] sm:$0xff]
    %v167 = vld [vmem:[%s3 + $0x78] sm:$0xff]
    %168 = vmatprep.subr.mxu0 0.0
    %169 = vmatpush1.msra.mxu0 %v152
    %170 = vmatprep.subr.mxu0 0.0
    %171 = vmatpush1.msra.mxu0 %v153
    %172 = vmatprep.subr.mxu0 0.0
    %173 = vmatpush1.msra.mxu0 %v154
    %174 = vmatprep.subr.mxu0 0.0
    %175 = vmatpush1.msra.mxu0 %v155
    %176 = vmatprep.subr.mxu0 0.0
    %177 = vmatpush1.msra.mxu0 %v156
    %178 = vmatprep.subr.mxu0 0.0
    %179 = vmatpush1.msra.mxu0 %v157
    %180 = vmatprep.subr.mxu0 0.0
    %181 = vmatpush1.msra.mxu0 %v158
    %182 = vmatprep.subr.mxu0 0.0
    %183 = vmatpush1.msra.mxu0 %v159
    %184 = vmatprep.subr.mxu0 0.0
    %185 = vmatpush1.msra.mxu0 %v160
    %186 = vmatprep.subr.mxu0 0.0
    %187 = vmatpush1.msra.mxu0 %v161
    %188 = vmatprep.subr.mxu0 0.0
    %189 = vmatpush1.msra.mxu0 %v162
    %190 = vmatprep.subr.mxu0 0.0
    %191 = vmatpush1.msra.mxu0 %v163
    %192 = vmatprep.subr.mxu0 0.0
    %193 = vmatpush1.msra.mxu0 %v164
    %194 = vmatprep.subr.mxu0 0.0
    %195 = vmatpush1.msra.mxu0 %v165
    %196 = vmatprep.subr.mxu0 0.0
    %197 = vmatpush1.msra.mxu0 %v166
    %198 = vmatprep.subr.mxu0 0.0
    %199 = vmatpush1.msra.mxu0 %v167
    %200 = vmatprep.subr.mxu0 0.0
    %201 = vmatpush1.msra.mxu0 0.0
    %202 = vmatprep.subr.mxu0 0.0
    %203 = vmatpush1.msra.mxu0 0.0
    %204 = vmatprep.subr.mxu0 0.0
    %205 = vmatpush1.msra.mxu0 0.0
    %206 = vmatprep.subr.mxu0 0.0
    %207 = vmatpush1.msra.mxu0 0.0
    %208 = vmatprep.subr.mxu0 0.0
    %209 = vmatpush1.msra.mxu0 0.0
    %210 = vmatprep.subr.mxu0 0.0
    %211 = vmatpush1.msra.mxu0 0.0
    %212 = vmatprep.subr.mxu0 0.0
    %213 = vmatpush1.msra.mxu0 0.0
    %214 = vmatprep.subr.mxu0 0.0
    %215 = vmatpush1.msra.mxu0 0.0
    %216 = vmatprep.subr.mxu0 0.0
    %217 = vmatpush1.msra.mxu0 0.0
    %218 = vmatprep.subr.mxu0 0.0
    %219 = vmatpush1.msra.mxu0 0.0
    %220 = vmatprep.subr.mxu0 0.0
    %221 = vmatpush1.msra.mxu0 0.0
    %222 = vmatprep.subr.mxu0 0.0
    %223 = vmatpush1.msra.mxu0 0.0
    %224 = vmatprep.subr.mxu0 0.0
    %225 = vmatpush1.msra.mxu0 0.0
    %226 = vmatprep.subr.mxu0 0.0
    %227 = vmatpush1.msra.mxu0 0.0
    %228 = vmatprep.subr.mxu0 0.0
    %229 = vmatpush1.msra.mxu0 0.0
    %230 = vmatprep.subr.mxu0 0.0
    %231 = vmatpush1.msra.mxu0 0.0
    %232 = vmatprep.mubr.f32.mxu0 0.0
    %233 = vmatmul.mubr.f32.gmra.mrb[0].mxu0 %v148
    %v234 = vpop.f32.mrb[0].mxu0
    %v235 = vadd.f32 0.0, %v234
    %v236 = vpop.f32.mrb[0].mxu0
    %237 = vmatprep.mubr.f32.mxu0 0.0
    %238 = vmatmul.mubr.f32.gmra.mrb[0].mxu0 %v149
    %v239 = vpop.f32.mrb[0].mxu0
    %v240 = vadd.f32 0.0, %v239
    %v241 = vpop.f32.mrb[0].mxu0
    %242 = vdwg.mxu0
    %v243 = vadd.f32 %v150, %v235
    %v244 = vadd.f32 %v151, %v240
    %245 = vst.msk [vmem:[#allocation2] sm:$0xff] %vm50, %v243
    %246 = vst.msk [vmem:[#allocation2 + $0x8] sm:$0xff] %vm50, %v244
    // Predicated region
    $region26: #{tpu_custom_call.1} parent=1 // pred_check
      %p247 = pneg %p21
    $region27: #{tpu_custom_call.1} parent=1 // pred_check_branch
      %249 = sbr.rel (%p247) target = $region29
    $region28: #{tpu_custom_call.1} parent=1 // pred_region
      %v250 = vld [vmem:[#allocation2] sm:$0xff]
      %v251 = vld [vmem:[#allocation2 + $0x8] sm:$0xff]
      %v252 = vld [vmem:[%s4] sm:$0x1]
      %v254 = vlaneseq
      %v255 = vshrl.u32 %v254, 7
      %v256 = vsub.s32 0, %v255
      %v257 = vrot.slane %v252, %v256
      %v259 = vadd.f32 %v250, %v257
      %v260 = vadd.f32 %v251, %v257
      %261 = vst.msk [vmem:[#allocation3] sm:$0xff] %vm50, %v259
      %262 = vst.msk [vmem:[#allocation3 + $0x8] sm:$0xff] %vm50, %v260
    $region29: #{tpu_custom_call.1} parent=1 // pred_fallthru
      _
    // Predicated region
    $region30: #{tpu_custom_call.1} parent=1 // pred_check
      _
    $region31: #{tpu_custom_call.1} parent=1 // pred_check_branch
      %264 = sbr.rel (0) target = $region33
    $region32: #{tpu_custom_call.1} parent=1 // pred_region
      %s266 = ssub.s32 256, 256
      %267 = vsyncadd [#allocation4], %s266
      %s268 = sshll.u32 [#allocation3], 4
      %s269 = int_to_ptr.vmem [resolvable:$true] %s268
      %274 = dma.vmem_to_hbm [thread:$0]  %s269, 256, %s5, [#allocation4], 128, 128, 8
    $region33: #{tpu_custom_call.1} parent=1 // pred_fallthru
      _
    // Predicated region
    $region34: #{tpu_custom_call.1} parent=1 // pred_check
      _
    $region35: #{tpu_custom_call.1} parent=1 // pred_check_branch
      %276 = sbr.rel (0) target = $region37
    $region36: #{tpu_custom_call.1} parent=1 // pred_region
      %277 = dma.done [#allocation4], 256
    $region37: #{tpu_custom_call.1} parent=1 // pred_fallthru
      _
    %278 = vsyncpa [#allocation4], 1

// kernel: tpu_custom_call.1
$region0: #{tpu_custom_call.1}
  #allocation0 [shape = 'u32[]', space=smem, size = 0x4, offset = 0x4, fixed_abs, tag = 'smem constant byte address 0x4 - core index']
  #allocation1 [shape = 'u32[144,128]{1,0:T(1,128)}', space=vmem, size = 0x12000, scoped, tag = 'internal scratch']
  #allocation2 [shape = 'f32[16,32]{1,0:T(8,128)}', space=vmem, size = 0x2000, scoped, tag = 'scratch operand']
  %s0 = inlined_call_operand.vmem [shape: f32[16,32], index: 0, kind: input, shape index: {}]
  %s1 = inlined_call_operand.vmem [shape: f32[32,256], index: 1, kind: input, shape index: {}]
  %s2 = inlined_call_operand.vmem [shape: f32[1,256], index: 2, kind: input, shape index: {}]
  %s3 = inlined_call_operand.vmem [shape: f32[128,32], index: 3, kind: input, shape index: {}]
  %s4 = inlined_call_operand.vmem [shape: f32[1,32], index: 4, kind: input, shape index: {}]
  %s5 = inlined_call_operand.hbm [shape: f32[16,32], index: 5, kind: output, shape index: {}]
  %s6 = sld [smem:[#allocation0]]
  $region38: #{tpu_custom_call.1} parent=0
    _
  %s8 = ssub.s32 1, %s6
  %s9 = scalar_select 0, %s8, %s6
  $region1: #{tpu_custom_call.1} parent=0
    #allocation3 [shape = 'u8[8192]{0}', space=vmem, size = 0x2000, scoped, tag = 'output window, operand 0, single buffered']
    #allocation4 [shape = 's32[1]{0}', space=sflag, size = 0x4, scoped, tag = 'scoped memory for tpu_custom_call.1']
    %10 = vsyncpa [#allocation4], 0
    // Predicated region
    $region2: #{tpu_custom_call.1} parent=1 // pred_check
      _
    $region3: #{tpu_custom_call.1} parent=1 // pred_check_branch
      %12 = sbr.rel (0) target = $region5
    $region4: #{tpu_custom_call.1} parent=1 // pred_region
      _
    $region5: #{tpu_custom_call.1} parent=1 // pred_fallthru
      _
    // Predicated region
    $region6: #{tpu_custom_call.1} parent=1 // pred_check
      _
    $region7: #{tpu_custom_call.1} parent=1 // pred_check_branch
      %14 = sbr.rel (0) target = $region9
    $region8: #{tpu_custom_call.1} parent=1 // pred_region
      _
    $region9: #{tpu_custom_call.1} parent=1 // pred_fallthru
      _
    // Predicated region
    $region10: #{tpu_custom_call.1} parent=1 // pred_check
      _
    $region11: #{tpu_custom_call.1} parent=1 // pred_check_branch
      %16 = sbr.rel (0) target = $region13
    $region12: #{tpu_custom_call.1} parent=1 // pred_region
      _
    $region13: #{tpu_custom_call.1} parent=1 // pred_fallthru
      _
    // Predicated region
    $region14: #{tpu_custom_call.1} parent=1 // pred_check
      _
    $region15: #{tpu_custom_call.1} parent=1 // pred_check_branch
      %18 = sbr.rel (0) target = $region17
    $region16: #{tpu_custom_call.1} parent=1 // pred_region
      _
    $region17: #{tpu_custom_call.1} parent=1 // pred_fallthru
      _
    // Predicated region
    $region18: #{tpu_custom_call.1} parent=1 // pred_check
      _
    $region19: #{tpu_custom_call.1} parent=1 // pred_check_branch
      %20 = sbr.rel (0) target = $region21
    $region20: #{tpu_custom_call.1} parent=1 // pred_region
      _
    $region21: #{tpu_custom_call.1} parent=1 // pred_fallthru
      _
    %p21 = scmp.eq.s32.totalorder 0, 0
    // Predicated region
    $region22: #{tpu_custom_call.1} parent=1 // pred_check
      %p22 = pneg %p21
    $region23: #{tpu_custom_call.1} parent=1 // pred_check_branch
      %24 = sbr.rel (%p22) target = $region25
    $region24: #{tpu_custom_call.1} parent=1 // pred_region
      %vm25 = vcmask 261120
      %26 = vst.msk [vmem:[#allocation2] sm:$0xff] %vm25, 0.0
      %27 = vst.msk [vmem:[#allocation2 + $0x8] sm:$0xff] %vm25, 0.0
    $region25: #{tpu_custom_call.1} parent=1 // pred_fallthru
      _
    %v28 = vld [vmem:[%s0] sm:$0xff]
    %v29 = vld [vmem:[%s0 + $0x8] sm:$0xff]
    %v30 = vld [vmem:[%s1] sm:$0xff]
    %v31 = vld [vmem:[%s1 + $0x8] sm:$0xff]
    %v32 = vld [vmem:[%s1 + $0x10] sm:$0xff]
    %v33 = vld [vmem:[%s1 + $0x18] sm:$0xff]
    %v34 = vld [vmem:[%s1 + $0x20] sm:$0xff]
    %v35 = vld [vmem:[%s1 + $0x28] sm:$0xff]
    %v36 = vld [vmem:[%s1 + $0x30] sm:$0xff]
    %v37 = vld [vmem:[%s1 + $0x38] sm:$0xff]
    %v38 = vld [vmem:[%s2] sm:$0x3]
    %v40 = vlaneseq
    %v41 = vshrl.u32 %v40, 7
    %v42 = vsub.s32 0, %v41
    %v43 = vrot.slane %v38, %v42
    %v44 = vlaneseq
    %v45 = vshrl.u32 %v44, 7
    %v46 = vsub.s32 1, %v45
    %v47 = vrot.slane %v38, %v46
    %vm50 = vcmask 261120
    %v52 = vsel %vm50, %v28, 0
    %v55 = vsel %vm50, %v29, 0
    %57 = vmatprep.subr.mxu0 %v31
    %58 = vmatpush1.msra.mxu0 %v30
    %59 = vmatprep.subr.mxu0 %v33
    %60 = vmatpush1.msra.mxu0 %v32
    %61 = vmatprep.subr.mxu0 %v35
    %62 = vmatpush1.msra.mxu0 %v34
    %63 = vmatprep.subr.mxu0 %v37
    %64 = vmatpush1.msra.mxu0 %v36
    %65 = vmatprep.subr.mxu0 0.0
    %66 = vmatpush1.msra.mxu0 0.0
    %67 = vmatprep.subr.mxu0 0.0
    %68 = vmatpush1.msra.mxu0 0.0
    %69 = vmatprep.subr.mxu0 0.0
    %70 = vmatpush1.msra.mxu0 0.0
    %71 = vmatprep.subr.mxu0 0.0
    %72 = vmatpush1.msra.mxu0 0.0
    %73 = vmatprep.subr.mxu0 0.0
    %74 = vmatpush1.msra.mxu0 0.0
    %75 = vmatprep.subr.mxu0 0.0
    %76 = vmatpush1.msra.mxu0 0.0
    %77 = vmatprep.subr.mxu0 0.0
    %78 = vmatpush1.msra.mxu0 0.0
    %79 = vmatprep.subr.mxu0 0.0
    %80 = vmatpush1.msra.mxu0 0.0
    %81 = vmatprep.subr.mxu0 0.0
    %82 = vmatpush1.msra.mxu0 0.0
    %83 = vmatprep.subr.mxu0 0.0
    %84 = vmatpush1.msra.mxu0 0.0
    %85 = vmatprep.subr.mxu0 0.0
    %86 = vmatpush1.msra.mxu0 0.0
    %87 = vmatprep.subr.mxu0 0.0
    %88 = vmatpush1.msra.mxu0 0.0
    %89 = vmatprep.subr.mxu0 0.0
    %90 = vmatpush1.msra.mxu0 0.0
    %91 = vmatprep.subr.mxu0 0.0
    %92 = vmatpush1.msra.mxu0 0.0
    %93 = vmatprep.subr.mxu0 0.0
    %94 = vmatpush1.msra.mxu0 0.0
    %95 = vmatprep.subr.mxu0 0.0
    %96 = vmatpush1.msra.mxu0 0.0
    %97 = vmatprep.subr.mxu0 0.0
    %98 = vmatpush1.msra.mxu0 0.0
    %99 = vmatprep.subr.mxu0 0.0
    %100 = vmatpush1.msra.mxu0 0.0
    %101 = vmatprep.subr.mxu0 0.0
    %102 = vmatpush1.msra.mxu0 0.0
    %103 = vmatprep.subr.mxu0 0.0
    %104 = vmatpush1.msra.mxu0 0.0
    %105 = vmatprep.subr.mxu0 0.0
    %106 = vmatpush1.msra.mxu0 0.0
    %107 = vmatprep.subr.mxu0 0.0
    %108 = vmatpush1.msra.mxu0 0.0
    %109 = vmatprep.subr.mxu0 0.0
    %110 = vmatpush1.msra.mxu0 0.0
    %111 = vmatprep.subr.mxu0 0.0
    %112 = vmatpush1.msra.mxu0 0.0
    %113 = vmatprep.subr.mxu0 0.0
    %114 = vmatpush1.msra.mxu0 0.0
    %115 = vmatprep.subr.mxu0 0.0
    %116 = vmatpush1.msra.mxu0 0.0
    %117 = vmatprep.subr.mxu0 0.0
    %118 = vmatpush1.msra.mxu0 0.0
    %119 = vmatprep.subr.mxu0 0.0
    %120 = vmatpush1.msra.mxu0 0.0
    %121 = vmatprep.mubr.f32.mxu0 0.0
    %122 = vmatmul.mubr.f32.gmra.mrb[0].mxu0 %v52
    %v123 = vpop.f32.mrb[0].mxu0
    %v124 = vadd.f32 %v43, %v123
    %v125 = vpop.f32.mrb[0].mxu0
    %v126 = vadd.f32 %v47, %v125
    %127 = vmatprep.mubr.f32.mxu0 0.0
    %128 = vmatmul.mubr.f32.gmra.mrb[0].mxu0 %v55
    %v129 = vpop.f32.mrb[0].mxu0
    %v130 = vadd.f32 %v43, %v129
    %v131 = vpop.f32.mrb[0].mxu0
    %v132 = vadd.f32 %v47, %v131
    %133 = vdwg.mxu0
    %v134 = vxor.u32 %v126, 2147483648
    %v135 = vxor.u32 %v132, 2147483648
    %v136 = vmul.f32 %v134, 1.442695
    %v137 = vpow.pop %v136
    %v138 = vmul.f32 %v135, 1.442695
    %v139 = vpow.pop %v138
    %v140 = vadd.f32 %v137, 1.0
    %v141 = vadd.f32 %v139, 1.0
    %v142 = vrcp.pop %v140
    %v143 = vmul.f32 1.0, %v142
    %v144 = vrcp.pop %v141
    %v145 = vmul.f32 1.0, %v144
    %v146 = vmul.f32 %v126, %v143
    %v147 = vmul.f32 %v132, %v145
    %v148 = vmul.f32 %v124, %v146
    %v149 = vmul.f32 %v130, %v147
    %v150 = vld [vmem:[#allocation2] sm:$0xff]
    %v151 = vld [vmem:[#allocation2 + $0x8] sm:$0xff]
    %v152 = vld [vmem:[%s3] sm:$0xff]
    %v153 = vld [vmem:[%s3 + $0x8] sm:$0xff]
    %v154 = vld [vmem:[%s3 + $0x10] sm:$0xff]
    %v155 = vld [vmem:[%s3 + $0x18] sm:$0xff]
    %v156 = vld [vmem:[%s3 + $0x20] sm:$0xff]
    %v157 = vld [vmem:[%s3 + $0x28] sm:$0xff]
    %v158 = vld [vmem:[%s3 + $0x30] sm:$0xff]
    %v159 = vld [vmem:[%s3 + $0x38] sm:$0xff]
    %v160 = vld [vmem:[%s3 + $0x40] sm:$0xff]
    %v161 = vld [vmem:[%s3 + $0x48] sm:$0xff]
    %v162 = vld [vmem:[%s3 + $0x50] sm:$0xff]
    %v163 = vld [vmem:[%s3 + $0x58] sm:$0xff]
    %v164 = vld [vmem:[%s3 + $0x60] sm:$0xff]
    %v165 = vld [vmem:[%s3 + $0x68] sm:$0xff]
    %v166 = vld [vmem:[%s3 + $0x70] sm:$0xff]
    %v167 = vld [vmem:[%s3 + $0x78] sm:$0xff]
    %168 = vmatprep.subr.mxu0 0.0
    %169 = vmatpush1.msra.mxu0 %v152
    %170 = vmatprep.subr.mxu0 0.0
    %171 = vmatpush1.msra.mxu0 %v153
    %172 = vmatprep.subr.mxu0 0.0
    %173 = vmatpush1.msra.mxu0 %v154
    %174 = vmatprep.subr.mxu0 0.0
    %175 = vmatpush1.msra.mxu0 %v155
    %176 = vmatprep.subr.mxu0 0.0
    %177 = vmatpush1.msra.mxu0 %v156
    %178 = vmatprep.subr.mxu0 0.0
    %179 = vmatpush1.msra.mxu0 %v157
    %180 = vmatprep.subr.mxu0 0.0
    %181 = vmatpush1.msra.mxu0 %v158
    %182 = vmatprep.subr.mxu0 0.0
    %183 = vmatpush1.msra.mxu0 %v159
    %184 = vmatprep.subr.mxu0 0.0
    %185 = vmatpush1.msra.mxu0 %v160
    %186 = vmatprep.subr.mxu0 0.0
    %187 = vmatpush1.msra.mxu0 %v161
    %188 = vmatprep.subr.mxu0 0.0
    %189 = vmatpush1.msra.mxu0 %v162
    %190 = vmatprep.subr.mxu0 0.0
    %191 = vmatpush1.msra.mxu0 %v163
    %192 = vmatprep.subr.mxu0 0.0
    %193 = vmatpush1.msra.mxu0 %v164
    %194 = vmatprep.subr.mxu0 0.0
    %195 = vmatpush1.msra.mxu0 %v165
    %196 = vmatprep.subr.mxu0 0.0
    %197 = vmatpush1.msra.mxu0 %v166
    %198 = vmatprep.subr.mxu0 0.0
    %199 = vmatpush1.msra.mxu0 %v167
    %200 = vmatprep.subr.mxu0 0.0
    %201 = vmatpush1.msra.mxu0 0.0
    %202 = vmatprep.subr.mxu0 0.0
    %203 = vmatpush1.msra.mxu0 0.0
    %204 = vmatprep.subr.mxu0 0.0
    %205 = vmatpush1.msra.mxu0 0.0
    %206 = vmatprep.subr.mxu0 0.0
    %207 = vmatpush1.msra.mxu0 0.0
    %208 = vmatprep.subr.mxu0 0.0
    %209 = vmatpush1.msra.mxu0 0.0
    %210 = vmatprep.subr.mxu0 0.0
    %211 = vmatpush1.msra.mxu0 0.0
    %212 = vmatprep.subr.mxu0 0.0
    %213 = vmatpush1.msra.mxu0 0.0
    %214 = vmatprep.subr.mxu0 0.0
    %215 = vmatpush1.msra.mxu0 0.0
    %216 = vmatprep.subr.mxu0 0.0
    %217 = vmatpush1.msra.mxu0 0.0
    %218 = vmatprep.subr.mxu0 0.0
    %219 = vmatpush1.msra.mxu0 0.0
    %220 = vmatprep.subr.mxu0 0.0
    %221 = vmatpush1.msra.mxu0 0.0
    %222 = vmatprep.subr.mxu0 0.0
    %223 = vmatpush1.msra.mxu0 0.0
    %224 = vmatprep.subr.mxu0 0.0
    %225 = vmatpush1.msra.mxu0 0.0
    %226 = vmatprep.subr.mxu0 0.0
    %227 = vmatpush1.msra.mxu0 0.0
    %228 = vmatprep.subr.mxu0 0.0
    %229 = vmatpush1.msra.mxu0 0.0
    %230 = vmatprep.subr.mxu0 0.0
    %231 = vmatpush1.msra.mxu0 0.0
    %232 = vmatprep.mubr.f32.mxu0 0.0
    %233 = vmatmul.mubr.f32.gmra.mrb[0].mxu0 %v148
    %v234 = vpop.f32.mrb[0].mxu0
    %v235 = vadd.f32 0.0, %v234
    %v236 = vpop.f32.mrb[0].mxu0
    %237 = vmatprep.mubr.f32.mxu0 0.0
    %238 = vmatmul.mubr.f32.gmra.mrb[0].mxu0 %v149
    %v239 = vpop.f32.mrb[0].mxu0
    %v240 = vadd.f32 0.0, %v239
    %v241 = vpop.f32.mrb[0].mxu0
    %242 = vdwg.mxu0
    %v243 = vadd.f32 %v150, %v235
    %v244 = vadd.f32 %v151, %v240
    %245 = vst.msk [vmem:[#allocation2] sm:$0xff] %vm50, %v243
    %246 = vst.msk [vmem:[#allocation2 + $0x8] sm:$0xff] %vm50, %v244
    // Predicated region
    $region26: #{tpu_custom_call.1} parent=1 // pred_check
      %p247 = pneg %p21
    $region27: #{tpu_custom_call.1} parent=1 // pred_check_branch
      %249 = sbr.rel (%p247) target = $region29
    $region28: #{tpu_custom_call.1} parent=1 // pred_region
      %v250 = vld [vmem:[#allocation2] sm:$0xff]
      %v251 = vld [vmem:[#allocation2 + $0x8] sm:$0xff]
      %v252 = vld [vmem:[%s4] sm:$0x1]
      %v254 = vlaneseq
      %v255 = vshrl.u32 %v254, 7
      %v256 = vsub.s32 0, %v255
      %v257 = vrot.slane %v252, %v256
      %v259 = vadd.f32 %v250, %v257
      %v260 = vadd.f32 %v251, %v257
      %261 = vst.msk [vmem:[#allocation3] sm:$0xff] %vm50, %v259
      %262 = vst.msk [vmem:[#allocation3 + $0x8] sm:$0xff] %vm50, %v260
    $region29: #{tpu_custom_call.1} parent=1 // pred_fallthru
      _
    // Predicated region
    $region30: #{tpu_custom_call.1} parent=1 // pred_check
      _
    $region31: #{tpu_custom_call.1} parent=1 // pred_check_branch
      %264 = sbr.rel (0) target = $region33
    $region32: #{tpu_custom_call.1} parent=1 // pred_region
      %s266 = ssub.s32 256, 256
      %267 = vsyncadd [#allocation4], %s266
      %s268 = sshll.u32 [#allocation3], 4
      %s269 = int_to_ptr.vmem [resolvable:$true] %s268
      %274 = dma.vmem_to_hbm [thread:$0]  %s269, 256, %s5, [#allocation4], 128, 128, 8
    $region33: #{tpu_custom_call.1} parent=1 // pred_fallthru
      _
    // Predicated region
    $region34: #{tpu_custom_call.1} parent=1 // pred_check
      _
    $region35: #{tpu_custom_call.1} parent=1 // pred_check_branch
      %276 = sbr.rel (0) target = $region37
    $region36: #{tpu_custom_call.1} parent=1 // pred_region
      %277 = dma.done [#allocation4], 256
    $region37: #{tpu_custom_call.1} parent=1 // pred_fallthru
      _
    %278 = vsyncpa [#allocation4], 1

</llo_original>
